<compile_context>
chip_gen: v7x
topology: tpu7x:2x2x1
jax: 0.10.0
libtpu: 0.0.40
codegen_flags: <defaults>
</compile_context>

<pallas_src>
import math

import jax
import jax.numpy as jnp
from jax.experimental import pallas as pl
from jax.experimental.pallas import tpu as pltpu


def _projector_kernel(x_ref, w_ref, pos_ref, tok_ref, sum_ref):
    # x_ref  : (bb, tt, PF)   packed input tokens
    # w_ref  : (PF, PH)       block-diagonal / lane-padded projection weight
    # pos_ref: (1,  tt, PH)   packed positional-embedding tile
    # tok_ref: (bb, tt, PH)   packed output tokens (lane-dense, PH % 128 == 0)
    # sum_ref: (bb, 1,  PH)   f32 running token sums, revisited across token axis
    bb, tt, pf = x_ref.shape
    ph = w_ref.shape[1]

    # One MXU matmul per grid step, f32 accumulate.
    x2d = x_ref[...].reshape(bb * tt, pf)
    y = jnp.dot(x2d, w_ref[...], preferred_element_type=jnp.float32)
    y = y.reshape(bb, tt, ph) + pos_ref[...].astype(jnp.float32)

    # Lane-dense token writeback (storage dtype follows the inputs).
    tok_ref[...] = y.astype(tok_ref.dtype)

    # Token-sum accumulator, resident in VMEM across the ("arbitrary") token
    # axis; finished (mean + L2-normalize) in plain JAX in f32.
    @pl.when(pl.program_id(1) == 0)
    def _():
        sum_ref[...] = jnp.zeros_like(sum_ref)

    sum_ref[...] += jnp.sum(y, axis=1, keepdims=True)


def _largest_divisor(n, cap, unit=1):
    """Largest d dividing n with d <= cap and d % unit == 0; falls back to n."""
    best = n if n <= cap else None
    d = unit
    limit = min(n, cap)
    while d <= limit:
        if n % d == 0 and (best is None or d > best):
            best = d
        d += unit
    return best if best is not None else n


def _projector_pallas(x, w, pos, *, vmem_budget_bytes=24 * 1024 * 1024):
    """x: (B, T, F), w: (F, H), pos: (1, T, H)
       -> (token_sums f32 (B, H), tokens (B, T, H))."""
    B, T, F = x.shape
    H = w.shape[1]
    dtype = x.dtype
    item = jnp.dtype(dtype).itemsize

    # ---- lane packing / padding so token stores use full 128-lane rows ------
    if H % 128 == 0:
        P, Hp = 1, H                                   # already lane-dense
    elif H < 128 and 128 % H == 0 and T % (128 // H) == 0:
        P, Hp = 128 // H, H                            # pack P tokens per row
    else:
        P, Hp = 1, ((H + 127) // 128) * 128            # zero-pad output lanes
    Tq, PF, PH = T // P, P * F, P * Hp

    # ---- wrapper-side packing (free reshapes / tiny pads; no (B,T,F) copy) --
    x_p = x.reshape(B, Tq, PF)
    if Hp != H:
        w = jnp.pad(w, ((0, 0), (0, Hp - H)))
        pos = jnp.pad(pos, ((0, 0), (0, 0), (0, Hp - H)))
    pos_p = pos.reshape(1, Tq, PH)
    if P > 1:
        # Block-diagonal weight: packed-row @ w_blk == per-token x @ w, with
        # the P tokens' outputs contiguous along the 128 lanes.
        eye = jnp.eye(P, dtype=w.dtype)
        w_p = jnp.einsum("ij,fh->ifjh", eye, w).reshape(PF, PH)
    else:
        w_p = w

    # ---- tile selection ------------------------------------------------------
    # Token tile: aim for >=2 tiles so DMA/compute/writeback pipeline even for
    # tiny batches; multiple of 16 keeps the (bb*tt, PF) reshape layout-free.
    if Tq >= 32:
        tt_cap = min(128, max(16, Tq // 2))
        tt = _largest_divisor(Tq, tt_cap, unit=16)
    else:
        tt = Tq

    # Batch block from a VMEM budget (double-buffered x/tok tiles, f32 matmul
    # intermediate, invariant w / pos tiles), capped at B//2 so the "parallel"
    # batch axis has >=2 steps for v7x megacore sharding.  bb divides B, so no
    # wrapper-side padding of x is ever needed.
    fixed = 2 * PF * PH * item + 2 * tt * PH * item          # w + pos buffers
    per_bb = (2 * tt * PF * item                              # x double-buffered
              + 2 * tt * PH * item                            # tok double-buffered
              + tt * PH * (4 + item)                          # f32 y + cast temp
              + 2 * PH * 4)                                   # sums buffers
    budget_bb = max(1, (vmem_budget_bytes - fixed) // per_bb)
    cap_bb = min(budget_bb, B if B < 2 else max(1, B // 2))
    bb = _largest_divisor(B, cap_bb, unit=1)

    grid = (B // bb, Tq // tt)

    cost = pl.CostEstimate(
        flops=2 * B * T * F * H,                 # true FLOPs (no packing zeros)
        transcendentals=0,
        bytes_accessed=(B * T * F * item         # x read
                        + B * T * Hp * item      # tokens write
                        + F * Hp * item          # weight
                        + T * Hp * item          # pos
                        + B * PH * 4),           # sums write
    )

    tokens_p, sums = pl.pallas_call(
        _projector_kernel,
        grid_spec=pltpu.PrefetchScalarGridSpec(
            num_scalar_prefetch=0,
            grid=grid,
            in_specs=[
                pl.BlockSpec((bb, tt, PF), lambda b, t: (b, t, 0)),
                pl.BlockSpec((PF, PH), lambda b, t: (0, 0)),
                pl.BlockSpec((1, tt, PH), lambda b, t: (0, t, 0)),
            ],
            out_specs=[
                pl.BlockSpec((bb, tt, PH), lambda b, t: (b, t, 0)),
                pl.BlockSpec((bb, 1, PH), lambda b, t: (b, 0, 0)),
            ],
        ),
        out_shape=(
            jax.ShapeDtypeStruct((B, Tq, PH), dtype),
            jax.ShapeDtypeStruct((B, 1, PH), jnp.float32),
        ),
        compiler_params=pltpu.CompilerParams(
            dimension_semantics=("parallel", "arbitrary"),
            vmem_limit_bytes=48 * 1024 * 1024,
        ),
        cost_estimate=cost,
    )(x_p, w_p, pos_p)

    tokens = tokens_p.reshape(B, T, Hp)
    token_sums = sums.reshape(B, P, Hp).sum(axis=1)
    if Hp != H:
        tokens = tokens[..., :H]
        token_sums = token_sums[..., :H]
    return token_sums, tokens


def ct_projector_forward(x, w, pos, num_tokens):
    """Mirror of CTProjector.forward.

    x   : (B, feat_dim) or (B, N, feat_dim)
    w   : (feat_dim, hidden_dim)   (torch reduce.weight.T)
    pos : (1, num_tokens, hidden_dim)
    Returns (img_emb (B, hidden_dim), tokens (B, num_tokens, hidden_dim)).
    """
    if x.ndim == 2:
        x = x[:, None, :]
    B, N, C = x.shape
    if N > num_tokens:
        idx = jnp.linspace(0.0, N - 1, num_tokens).astype(jnp.int32)
        x = x[:, idx]
    elif N < num_tokens:
        # torch's repeat-then-slice == modular gather.
        x = x[:, jnp.arange(num_tokens) % N]

    token_sums, tokens = _projector_pallas(x, w, pos)

    # F.normalize(mean(tokens, 1), dim=-1) in f32 from the kernel's f32 sums.
    img_emb = token_sums / num_tokens
    img_emb = img_emb / jnp.maximum(
        jnp.linalg.norm(img_emb, axis=-1, keepdims=True), 1e-12)
    return img_emb.astype(x.dtype), tokens


if __name__ == "__main__":
    # Small, deterministic test shapes consistent with the module.
    B = 2
    N = 512          # patch tokens before reduction (> num_tokens path)
    feat_dim = 64
    hidden_dim = 32
    num_tokens = 256

    key = jax.random.PRNGKey(0)
    kx, kw, kp, kw2, kp2 = jax.random.split(key, 5)

    x = jax.random.normal(kx, (B, N, feat_dim), dtype=jnp.float32)
    # nn.Linear(feat_dim, hidden_dim, bias=False): weight is (hidden, feat);
    # we store its transpose so the kernel computes x @ w directly.
    w = (jax.random.normal(kw, (feat_dim, hidden_dim), dtype=jnp.float32)
         * (1.0 / math.sqrt(feat_dim)))
    pos = jax.random.normal(kp, (1, num_tokens, hidden_dim),
                            dtype=jnp.float32) * 0.02

    # Pure-JAX reference.
    idx = jnp.linspace(0.0, N - 1, num_tokens).astype(jnp.int32)
    x_sel = x[:, idx]
    ref_tok = jnp.einsum("bnf,fh->bnh", x_sel, w,
                         preferred_element_type=jnp.float32) + pos
    ref_emb = ref_tok.mean(axis=1)
    ref_emb = ref_emb / jnp.maximum(
        jnp.linalg.norm(ref_emb, axis=-1, keepdims=True), 1e-12)

    # ---- f32 storage path: tight correctness check --------------------------
    img_emb, tokens = ct_projector_forward(x, w, pos, num_tokens)
    jax.block_until_ready((img_emb, tokens))
    assert tokens.shape == (B, num_tokens, hidden_dim)
    assert img_emb.shape == (B, hidden_dim)
    assert jnp.allclose(tokens, ref_tok, atol=1e-5, rtol=1e-5)
    assert jnp.allclose(img_emb, ref_emb, atol=1e-5, rtol=1e-5)

    # ---- bf16 storage path (halved HBM traffic; f32 accumulate inside) ------
    emb16, tok16 = ct_projector_forward(
        x.astype(jnp.bfloat16), w.astype(jnp.bfloat16),
        pos.astype(jnp.bfloat16), num_tokens)
    jax.block_until_ready((emb16, tok16))
    assert tok16.dtype == jnp.bfloat16 and emb16.dtype == jnp.bfloat16
    assert jnp.allclose(tok16.astype(jnp.float32), ref_tok,
                        atol=7.5e-2, rtol=5e-2)
    assert jnp.allclose(emb16.astype(jnp.float32), ref_emb,
                        atol=2e-2, rtol=5e-2)

    # ---- (B, feat_dim) global-feature path (N < num_tokens repeat) ----------
    xg = x[:, 0, :]
    emb_g, tok_g = ct_projector_forward(xg, w, pos, num_tokens)
    jax.block_until_ready((emb_g, tok_g))
    assert tok_g.shape == (B, num_tokens, hidden_dim)
    ref_tok_g = jnp.einsum("bf,fh->bh", xg, w)[:, None, :] + pos
    assert jnp.allclose(tok_g, ref_tok_g, atol=1e-5, rtol=1e-5)

    # ---- hidden_dim that does not divide 128 (lane-padded path) -------------
    H2 = 48
    w2 = (jax.random.normal(kw2, (feat_dim, H2), dtype=jnp.float32)
          * (1.0 / math.sqrt(feat_dim)))
    pos2 = jax.random.normal(kp2, (1, num_tokens, H2), dtype=jnp.float32) * 0.02
    x2 = x[:, :num_tokens]                       # N == num_tokens path
    emb2, tok2 = ct_projector_forward(x2, w2, pos2, num_tokens)
    jax.block_until_ready((emb2, tok2))
    ref_tok2 = jnp.einsum("bnf,fh->bnh", x2, w2,
                          preferred_element_type=jnp.float32) + pos2
    ref_emb2 = ref_tok2.mean(axis=1)
    ref_emb2 = ref_emb2 / jnp.maximum(
        jnp.linalg.norm(ref_emb2, axis=-1, keepdims=True), 1e-12)
    assert tok2.shape == (B, num_tokens, H2)
    assert jnp.allclose(tok2, ref_tok2, atol=1e-5, rtol=1e-5)
    assert jnp.allclose(emb2, ref_emb2, atol=1e-5, rtol=1e-5)

    print("KERNEL_OK")
</pallas_src>

<mosaic_0001>
module attributes {stable_mosaic.version = 11 : i64} {
  func.func @_projector_kernel(%arg0: i32, %arg1: i32, %arg2: memref<1x32x256xf32, #tpu.memory_space<vmem>>, %arg3: memref<256x128xf32, #tpu.memory_space<vmem>>, %arg4: memref<1x32x128xf32, #tpu.memory_space<vmem>>, %arg5: memref<1x32x128xf32, #tpu.memory_space<vmem>>, %arg6: memref<1x1x128xf32, #tpu.memory_space<vmem>>) attributes {dimension_semantics = [#tpu.dimension_semantics<parallel>, #tpu.dimension_semantics<arbitrary>], iteration_bounds = array<i64: 2, 2>, scalar_prefetch = 0 : i64, scratch_operands = 0 : i64, tpu.core_type = #tpu.core_type<tc>, window_params = [{transform_indices = @transform_0, window_bounds = array<i64: 1, 32, 256>}, {pipeline_mode = #tpu.pipeline_mode<synchronous>, transform_indices = @transform_1, window_bounds = array<i64: 256, 128>}, {transform_indices = @transform_2, window_bounds = array<i64: 1, 32, 128>}, {transform_indices = @transform_3, window_bounds = array<i64: 1, 32, 128>}, {transform_indices = @transform_4, window_bounds = array<i64: 1, 1, 128>}]} {
    %c0 = arith.constant 0 : index
    %c0_0 = arith.constant 0 : index
    %c0_1 = arith.constant 0 : index
    %0 = vector.load %arg2[%c0, %c0_0, %c0_1] : memref<1x32x256xf32, #tpu.memory_space<vmem>>, vector<1x32x256xf32>
    %1 = vector.shape_cast %0 : vector<1x32x256xf32> to vector<32x256xf32>
    %c0_2 = arith.constant 0 : index
    %c0_3 = arith.constant 0 : index
    %2 = vector.load %arg3[%c0_2, %c0_3] : memref<256x128xf32, #tpu.memory_space<vmem>>, vector<256x128xf32>
    %cst = arith.constant dense<0.000000e+00> : vector<32x128xf32>
    %3 = tpu.matmul %1, %2, %cst {dimension_numbers = #tpu.dot_dimension_numbers<[1], [0], [0], [1], [0, 0, 1, 1], [], []>} : vector<32x256xf32>, vector<256x128xf32>, vector<32x128xf32> -> vector<32x128xf32>
    %4 = vector.shape_cast %3 : vector<32x128xf32> to vector<1x32x128xf32>
    %c0_4 = arith.constant 0 : index
    %c0_5 = arith.constant 0 : index
    %c0_6 = arith.constant 0 : index
    %5 = vector.load %arg4[%c0_4, %c0_5, %c0_6] : memref<1x32x128xf32, #tpu.memory_space<vmem>>, vector<1x32x128xf32>
    %6 = arith.addf %4, %5 : vector<1x32x128xf32>
    %c0_7 = arith.constant 0 : index
    %c0_8 = arith.constant 0 : index
    %c0_9 = arith.constant 0 : index
    %7 = vector.load %arg5[%c0_7, %c0_8, %c0_9] : memref<1x32x128xf32, #tpu.memory_space<vmem>>, vector<1x32x128xf32>
    tpu.vector_store %arg5[%c0_7, %c0_8, %c0_9], %6 {strides = array<i32>} : memref<1x32x128xf32, #tpu.memory_space<vmem>>, vector<1x32x128xf32>,
    %c0_i32 = arith.constant 0 : i32
    %8 = arith.cmpi eq, %arg1, %c0_i32 : i32
    %9 = arith.extui %8 : i1 to i32
    %c0_i32_10 = arith.constant 0 : i32
    %10 = arith.cmpi ne, %9, %c0_i32_10 : i32
    scf.if %10 {
      %cst_18 = arith.constant 0.000000e+00 : f32
      %16 = vector.broadcast %cst_18 : f32 to vector<1x1x128xf32>
      %c0_19 = arith.constant 0 : index
      %c0_20 = arith.constant 0 : index
      %c0_21 = arith.constant 0 : index
      %17 = vector.load %arg6[%c0_19, %c0_20, %c0_21] : memref<1x1x128xf32, #tpu.memory_space<vmem>>, vector<1x1x128xf32>
      tpu.vector_store %arg6[%c0_19, %c0_20, %c0_21], %16 {strides = array<i32>} : memref<1x1x128xf32, #tpu.memory_space<vmem>>, vector<1x1x128xf32>,
    } else {
    }
    %c0_11 = arith.constant 0 : index
    %c0_12 = arith.constant 0 : index
    %c0_13 = arith.constant 0 : index
    %11 = vector.load %arg6[%c0_11, %c0_12, %c0_13] : memref<1x1x128xf32, #tpu.memory_space<vmem>>, vector<1x1x128xf32>
    %cst_14 = arith.constant dense<0.000000e+00> : vector<1x128xf32>
    %12 = vector.multi_reduction <add>, %6, %cst_14 [1] : vector<1x32x128xf32> to vector<1x128xf32>
    %13 = vector.shape_cast %12 : vector<1x128xf32> to vector<1x1x128xf32>
    %14 = arith.addf %11, %13 : vector<1x1x128xf32>
    %c0_15 = arith.constant 0 : index
    %c0_16 = arith.constant 0 : index
    %c0_17 = arith.constant 0 : index
    %15 = vector.load %arg6[%c0_15, %c0_16, %c0_17] : memref<1x1x128xf32, #tpu.memory_space<vmem>>, vector<1x1x128xf32>
    tpu.vector_store %arg6[%c0_15, %c0_16, %c0_17], %14 {strides = array<i32>} : memref<1x1x128xf32, #tpu.memory_space<vmem>>, vector<1x1x128xf32>,
    return
  }
  func.func @transform_0(%arg0: i32, %arg1: i32) -> (i32, i32, i32) {
    %c0_i32 = arith.constant 0 : i32
    %c0_i32_0 = arith.constant 0 : i32
    return %arg0, %arg1, %c0_i32 : i32, i32, i32
  }
  func.func @transform_1(%arg0: i32, %arg1: i32) -> (i32, i32) {
    %c0_i32 = arith.constant 0 : i32
    %c0_i32_0 = arith.constant 0 : i32
    %c0_i32_1 = arith.constant 0 : i32
    return %c0_i32, %c0_i32_0 : i32, i32
  }
  func.func @transform_2(%arg0: i32, %arg1: i32) -> (i32, i32, i32) {
    %c0_i32 = arith.constant 0 : i32
    %c0_i32_0 = arith.constant 0 : i32
    %c0_i32_1 = arith.constant 0 : i32
    return %c0_i32, %arg1, %c0_i32_0 : i32, i32, i32
  }
  func.func @transform_3(%arg0: i32, %arg1: i32) -> (i32, i32, i32) {
    %c0_i32 = arith.constant 0 : i32
    %c0_i32_0 = arith.constant 0 : i32
    return %arg0, %arg1, %c0_i32 : i32, i32, i32
  }
  func.func @transform_4(%arg0: i32, %arg1: i32) -> (i32, i32, i32) {
    %c0_i32 = arith.constant 0 : i32
    %c0_i32_0 = arith.constant 0 : i32
    %c0_i32_1 = arith.constant 0 : i32
    return %arg0, %c0_i32, %c0_i32_0 : i32, i32, i32
  }
}

</mosaic_0001>

<llo_original>
// kernel: tpu_custom_call.1
$region0: #{tpu_custom_call.1}
  #allocation0 [shape = 'u32[]', space=smem, size = 0x4, offset = 0x4, fixed_abs, tag = 'smem constant byte address 0x4 - core index']
  #allocation1 [shape = 'u32[144,128]{1,0:T(1,128)}', space=vmem, size = 0x12000, scoped, tag = 'internal scratch']
  %s0 = inlined_call_operand.hbm [shape: f32[2,64,256], index: 0, kind: input, shape index: {}]
  %s1 = inlined_call_operand.hbm [shape: f32[256,128], index: 1, kind: input, shape index: {}]
  %s2 = inlined_call_operand.hbm [shape: f32[1,64,128], index: 2, kind: input, shape index: {}]
  %s3 = inlined_call_operand.hbm [shape: f32[2,64,128], index: 3, kind: output, shape index: {0}]
  %s4 = inlined_call_operand.hbm [shape: f32[2,1,128], index: 4, kind: output, shape index: {1}]
  %5 = xla_tuple %s3, %s4
  %s6 = sld [smem:[#allocation0]]
  $region69: #{tpu_custom_call.1} parent=0
    _
  %s8 = ssub.s32 1, %s6
  %s9 = scalar_select 0, %s8, %s6
  $region1: #{tpu_custom_call.1} parent=0
    #allocation2 [shape = 'u8[65536]{0}', space=vmem, size = 0x10000, scoped, tag = 'input window, operand 0']
    #allocation3 [shape = 's32[2]{0}', space=sflag, size = 0x8, scoped, tag = 'scoped memory for tpu_custom_call.1']
    #allocation4 [shape = 's32[2]{0}', space=sflag, size = 0x8, scoped, tag = 'scoped memory for tpu_custom_call.1']
    #allocation5 [shape = 'u8[131072]{0}', space=vmem, size = 0x20000, scoped, tag = 'input window, operand 1, single buffered']
    #allocation6 [shape = 's32[1]{0}', space=sflag, size = 0x4, scoped, tag = 'scoped memory for tpu_custom_call.1']
    #allocation7 [shape = 'u8[32768]{0}', space=vmem, size = 0x8000, scoped, tag = 'input window, operand 2']
    #allocation8 [shape = 'u8[32768]{0}', space=vmem, size = 0x8000, scoped, tag = 'output window, operand 0']
    #allocation9 [shape = 'u8[1024]{0}', space=vmem, size = 0x400, scoped, tag = 'output window, operand 1']
    #allocation10 [shape = 's32[2]{0}', space=sflag, size = 0x8, scoped, tag = 'scoped memory for tpu_custom_call.1']
    %10 = vsyncpa [#allocation3], 0
    %s11 = scalar_lea.sflag [#allocation3], 1
    %12 = vsyncpa %s11, 0
    %13 = vsyncpa [#allocation6], 0
    %14 = vsyncpa [#allocation4], 0
    %s15 = scalar_lea.sflag [#allocation4], 1
    %16 = vsyncpa %s15, 0
    %17 = vsyncpa [#allocation10], 0
    %s18 = scalar_lea.sflag [#allocation10], 1
    %19 = vsyncpa %s18, 0
    loop: start=0, step=1, limit=6
    $region2: #{tpu_custom_call.1} parent=1 // loop_pre_header
      _
    $region3: #{tpu_custom_call.1} parent=1 // loop_header
      %s21 = sphi 0, %s25
      %p22 = scmp.ge.s32.totalorder %s21, 6
      %s28 = sphi 0, %s40
      %s29 = sphi 0, %s36
      %s30 = sphi 0, %s28
      %s31 = sphi 0, %s29
      %s32 = sphi 0, %s30
      %s33 = sphi 0, %s31
      %s45 = sphi 0, %s47
      %s48 = sphi 0, %s45
      %s49 = sphi 0, %s48
      %s65 = sphi 0, %s49
      %s69 = sphi 0, %s69
      %s71 = sphi 0, %s69
      %s72 = sphi 0, %s71
      %s86 = sphi 0, %s72
      %s92 = sphi 0, %s94
      %s95 = sphi 0, %s92
      %s96 = sphi 0, %s95
      %s112 = sphi 0, %s96
      %s120 = sphi 0, %s122
      %s123 = sphi 0, %s120
      %s124 = sphi 0, %s123
      %s140 = sphi 0, %s124
      %s146 = sphi 0, %s148
      %s149 = sphi 0, %s146
      %s150 = sphi 0, %s149
      %s166 = sphi 0, %s150
    $region4: #{tpu_custom_call.1} parent=1 // loop_header_branch
      %24 = sbr.rel (%p22) target = $region8
    $region5: #{tpu_custom_call.1} parent=1 // loop_body
      %s26 = ssub.s32 %s21, 1
      %s27 = ssub.s32 %s21, 2
      %s34 = sadd.s32 1, %s29
      %p35 = scmp.ge.s32.totalorder %s34, 2
      %s36 = scalar_select %p35, 0, %s34
      %s37 = sadd.s32 1, %s28
      %s38 = scalar_select %p35, %s37, %s28
      %p39 = scmp.ge.s32.totalorder %s38, 2
      %s40 = scalar_select %p39, 0, %s38
      %s41 = ssub.s32 %s28, %s40
      %s42 = ssub.s32 %s29, %s36
      %s43 = sor.u32 %s41, %s42
      %p44 = scmp.eq.s32.totalorder %s43, 0
      %s46 = sadd.s32 %s45, 1
      %s47 = scalar_select %p44, %s45, %s46
      %p50 = pneg %p44
      %p51 = scmp.eq.s32.totalorder %s21, 3
      %p52 = por %p50, %p51
      %p53 = scmp.ne.s32.totalorder %s45, %s48
      %p54 = scmp.eq.s32.totalorder %s21, 0
      %p55 = por %p53, %p54
      %p56 = scmp.ne.s32.totalorder %s45, %s48
      %p57 = scmp.eq.s32.totalorder %s26, 3
      %p58 = por %p56, %p57
      %p59 = scmp.ne.s32.totalorder %s48, %s49
      %p60 = scmp.eq.s32.totalorder %s26, 0
      %p61 = por %p59, %p60
      %p62 = scmp.ne.s32.totalorder %s48, %s49
      %p63 = scmp.eq.s32.totalorder %s27, 3
      %p64 = por %p62, %p63
      %p66 = scmp.ne.s32.totalorder %s49, %s65
      %p67 = scmp.eq.s32.totalorder %s27, 0
      %p68 = por %p66, %p67
      %s70 = sadd.s32 %s69, 1
      %p73 = scmp.eq.s32.totalorder %s21, 3
      %p74 = scmp.ne.s32.totalorder %s69, %s71
      %p75 = scmp.eq.s32.totalorder %s21, 0
      %p76 = por %p74, %p75
      %p77 = scmp.ne.s32.totalorder %s69, %s71
      %p78 = scmp.eq.s32.totalorder %s26, 3
      %p79 = por %p77, %p78
      %p80 = scmp.ne.s32.totalorder %s71, %s72
      %p81 = scmp.eq.s32.totalorder %s26, 0
      %p82 = por %p80, %p81
      %p83 = scmp.ne.s32.totalorder %s71, %s72
      %p84 = scmp.eq.s32.totalorder %s27, 3
      %p85 = por %p83, %p84
      %p87 = scmp.ne.s32.totalorder %s72, %s86
      %p88 = scmp.eq.s32.totalorder %s27, 0
      %p89 = por %p87, %p88
      %s90 = ssub.s32 %s29, %s36
      %p91 = scmp.eq.s32.totalorder %s90, 0
      %s93 = sadd.s32 %s92, 1
      %s94 = scalar_select %p91, %s92, %s93
      %p97 = pneg %p91
      %p98 = scmp.eq.s32.totalorder %s21, 3
      %p99 = por %p97, %p98
      %p100 = scmp.ne.s32.totalorder %s92, %s95
      %p101 = scmp.eq.s32.totalorder %s21, 0
      %p102 = por %p100, %p101
      %p103 = scmp.ne.s32.totalorder %s92, %s95
      %p104 = scmp.eq.s32.totalorder %s26, 3
      %p105 = por %p103, %p104
      %p106 = scmp.ne.s32.totalorder %s95, %s96
      %p107 = scmp.eq.s32.totalorder %s26, 0
      %p108 = por %p106, %p107
      %p109 = scmp.ne.s32.totalorder %s95, %s96
      %p110 = scmp.eq.s32.totalorder %s27, 3
      %p111 = por %p109, %p110
      %p113 = scmp.ne.s32.totalorder %s96, %s112
      %p114 = scmp.eq.s32.totalorder %s27, 0
      %p115 = por %p113, %p114
      %s116 = ssub.s32 %s28, %s40
      %s117 = ssub.s32 %s29, %s36
      %s118 = sor.u32 %s116, %s117
      %p119 = scmp.eq.s32.totalorder %s118, 0
      %s121 = sadd.s32 %s120, 1
      %s122 = scalar_select %p119, %s120, %s121
      %p125 = pneg %p119
      %p126 = scmp.eq.s32.totalorder %s21, 3
      %p127 = por %p125, %p126
      %p128 = scmp.ne.s32.totalorder %s120, %s123
      %p129 = scmp.eq.s32.totalorder %s21, 0
      %p130 = por %p128, %p129
      %p131 = scmp.ne.s32.totalorder %s120, %s123
      %p132 = scmp.eq.s32.totalorder %s26, 3
      %p133 = por %p131, %p132
      %p134 = scmp.ne.s32.totalorder %s123, %s124
      %p135 = scmp.eq.s32.totalorder %s26, 0
      %p136 = por %p134, %p135
      %p137 = scmp.ne.s32.totalorder %s123, %s124
      %p138 = scmp.eq.s32.totalorder %s27, 3
      %p139 = por %p137, %p138
      %p141 = scmp.ne.s32.totalorder %s124, %s140
      %p142 = scmp.eq.s32.totalorder %s27, 0
      %p143 = por %p141, %p142
      %s144 = ssub.s32 %s28, %s40
      %p145 = scmp.eq.s32.totalorder %s144, 0
      %s147 = sadd.s32 %s146, 1
      %s148 = scalar_select %p145, %s146, %s147
      %p151 = pneg %p145
      %p152 = scmp.eq.s32.totalorder %s21, 3
      %p153 = por %p151, %p152
      %p154 = scmp.ne.s32.totalorder %s146, %s149
      %p155 = scmp.eq.s32.totalorder %s21, 0
      %p156 = por %p154, %p155
      %p157 = scmp.ne.s32.totalorder %s146, %s149
      %p158 = scmp.eq.s32.totalorder %s26, 3
      %p159 = por %p157, %p158
      %p160 = scmp.ne.s32.totalorder %s149, %s150
      %p161 = scmp.eq.s32.totalorder %s26, 0
      %p162 = por %p160, %p161
      %p163 = scmp.ne.s32.totalorder %s149, %s150
      %p164 = scmp.eq.s32.totalorder %s27, 3
      %p165 = por %p163, %p164
      %p167 = scmp.ne.s32.totalorder %s150, %s166
      %p168 = scmp.eq.s32.totalorder %s27, 0
      %p169 = por %p167, %p168
      %p170 = scmp.le.s32.totalorder 1, %s21
      %p171 = scmp.lt.s32.totalorder %s21, 5
      %p172 = pnand %p170, %p171
      %p173 = pneg %p172
      // Predicated region
      $region9: #{tpu_custom_call.1} parent=5 // pred_check
        _
      $region10: #{tpu_custom_call.1} parent=5 // pred_check_branch
        %175 = sbr.rel (%p172) target = $region12
      $region11: #{tpu_custom_call.1} parent=5 // pred_region
        %s176 = ssub.s32 %s21, 1
        // Predicated region
        $region13: #{tpu_custom_call.1} parent=11 // pred_check
          %p177 = pneg %p82
        $region14: #{tpu_custom_call.1} parent=11 // pred_check_branch
          %179 = sbr.rel (%p177) target = $region16
        $region15: #{tpu_custom_call.1} parent=11 // pred_region
          %s181 = ssub.s32 4096, 4096
          %182 = vsyncadd [#allocation6], %s181
          %s183 = sshll.u32 [#allocation5], 4
          %s184 = int_to_ptr.vmem [resolvable:$true] %s183
          %189 = dma.hbm_to_vmem [thread:$0]  %s1, 4096, %s184, [#allocation6], 128, 128, 8
        $region16: #{tpu_custom_call.1} parent=11 // pred_fallthru
          _
      $region12: #{tpu_custom_call.1} parent=5 // pred_fallthru
        _
      %p190 = scmp.lt.s32.totalorder %s21, 4
      // Predicated region
      $region17: #{tpu_custom_call.1} parent=5 // pred_check
        %p191 = pneg %p190
      $region18: #{tpu_custom_call.1} parent=5 // pred_check_branch
        %193 = sbr.rel (%p191) target = $region20
      $region19: #{tpu_custom_call.1} parent=5 // pred_region
        // Predicated region
        $region21: #{tpu_custom_call.1} parent=19 // pred_check
          %p194 = pneg %p55
        $region22: #{tpu_custom_call.1} parent=19 // pred_check_branch
          %196 = sbr.rel (%p194) target = $region24
        $region23: #{tpu_custom_call.1} parent=19 // pred_region
          %s197 = sand.u32 %s21, 1
          %s198 = scalar_lea.sflag [#allocation3], %s197
          %s199 = sand.u32 %s45, 1
          %s200 = smul.addr %s199, 64
          %s201 = scalar_lea.vmem [#allocation2], %s200
          %s202 = smul.u32 4, %s29
          %s204 = ssub.s32 1024, 1024
          %205 = vsyncadd %s198, %s204
          %s206 = smul.addr %s202, 2
          %s207 = smul.addr %s28, 16
          %s208 = sadd.s32 %s206, %s207
          %s209 = smul.addr %s208, 128
          %s210 = scalar_lea.hbm %s0, %s209
          %s211 = sshll.u32 %s201, 4
          %s212 = int_to_ptr.vmem [resolvable:$true] %s211
          %217 = dma.hbm_to_vmem [thread:$0]  %s210, 1024, %s212, %s198, 256, 256, 16
        $region24: #{tpu_custom_call.1} parent=19 // pred_fallthru
          _
        // Predicated region
        $region25: #{tpu_custom_call.1} parent=19 // pred_check
          %p218 = pneg %p102
        $region26: #{tpu_custom_call.1} parent=19 // pred_check_branch
          %220 = sbr.rel (%p218) target = $region28
        $region27: #{tpu_custom_call.1} parent=19 // pred_region
          %s221 = sand.u32 %s21, 1
          %s222 = scalar_lea.sflag [#allocation3], %s221
          %s223 = sand.u32 %s92, 1
          %s224 = smul.addr %s223, 32
          %s225 = scalar_lea.vmem [#allocation7], %s224
          %s226 = smul.u32 4, %s29
          %s228 = ssub.s32 512, 512
          %229 = vsyncadd %s222, %s228
          %s230 = smul.addr %s226, 128
          %s231 = scalar_lea.hbm %s2, %s230
          %s232 = sshll.u32 %s225, 4
          %s233 = int_to_ptr.vmem [resolvable:$true] %s232
          %238 = dma.hbm_to_vmem [thread:$0]  %s231, 512, %s233, %s222, 128, 128, 8
        $region28: #{tpu_custom_call.1} parent=19 // pred_fallthru
          _
      $region20: #{tpu_custom_call.1} parent=5 // pred_fallthru
        _
      %p239 = scmp.le.s32.totalorder 1, %s21
      %p240 = scmp.lt.s32.totalorder %s21, 5
      %p241 = pnand %p239, %p240
      %p242 = pneg %p241
      // Predicated region
      $region29: #{tpu_custom_call.1} parent=5 // pred_check
        _
      $region30: #{tpu_custom_call.1} parent=5 // pred_check_branch
        %244 = sbr.rel (%p241) target = $region32
      $region31: #{tpu_custom_call.1} parent=5 // pred_region
        %s245 = ssub.s32 %s21, 1
        %s246 = sand.u32 %s26, 1
        %s247 = scalar_lea.sflag [#allocation3], %s246
        %s248 = sand.u32 %s48, 1
        %s249 = smul.addr %s248, 64
        %s250 = scalar_lea.vmem [#allocation2], %s249
        // Predicated region
        $region33: #{tpu_custom_call.1} parent=31 // pred_check
          %p251 = pneg %p61
        $region34: #{tpu_custom_call.1} parent=31 // pred_check_branch
          %253 = sbr.rel (%p251) target = $region36
        $region35: #{tpu_custom_call.1} parent=31 // pred_region
          %254 = dma.done %s247, 1024
        $region36: #{tpu_custom_call.1} parent=31 // pred_fallthru
          _
        // Predicated region
        $region37: #{tpu_custom_call.1} parent=31 // pred_check
          %p255 = pneg %p82
        $region38: #{tpu_custom_call.1} parent=31 // pred_check_branch
          %257 = sbr.rel (%p255) target = $region40
        $region39: #{tpu_custom_call.1} parent=31 // pred_region
          %258 = dma.done [#allocation6], 4096
        $region40: #{tpu_custom_call.1} parent=31 // pred_fallthru
          _
        %s259 = sand.u32 %s26, 1
        %s260 = scalar_lea.sflag [#allocation3], %s259
        %s261 = sand.u32 %s95, 1
        %s262 = smul.addr %s261, 32
        %s263 = scalar_lea.vmem [#allocation7], %s262
        // Predicated region
        $region41: #{tpu_custom_call.1} parent=31 // pred_check
          %p264 = pneg %p108
        $region42: #{tpu_custom_call.1} parent=31 // pred_check_branch
          %266 = sbr.rel (%p264) target = $region44
        $region43: #{tpu_custom_call.1} parent=31 // pred_region
          %267 = dma.done %s260, 512
        $region44: #{tpu_custom_call.1} parent=31 // pred_fallthru
          _
        %s268 = sand.u32 %s26, 1
        %s269 = scalar_lea.sflag [#allocation3], %s268
        %s270 = sand.u32 %s48, 1
        %s271 = smul.addr %s270, 64
        %s272 = scalar_lea.vmem [#allocation2], %s271
        %p273 = pneg %p61
        %p274 = pneg %p58
        %p275 = pneg %p82
        %p276 = pneg %p79
        %s277 = sand.u32 %s26, 1
        %s278 = scalar_lea.sflag [#allocation3], %s277
        %s279 = sand.u32 %s95, 1
        %s280 = smul.addr %s279, 32
        %s281 = scalar_lea.vmem [#allocation7], %s280
        %p282 = pneg %p108
        %p283 = pneg %p105
        %p284 = pneg %p136
        %p285 = pneg %p133
        %s286 = sand.u32 %s123, 1
        %s287 = scalar_lea.sflag [#allocation4], %s286
        %s288 = sand.u32 %s123, 1
        %s289 = smul.addr %s288, 32
        %s290 = scalar_lea.vmem [#allocation8], %s289
        %p291 = pneg %p162
        %p292 = pneg %p159
        %s293 = sand.u32 %s149, 1
        %s294 = scalar_lea.sflag [#allocation10], %s293
        %s295 = sand.u32 %s149, 1
        %s296 = scalar_lea.vmem [#allocation9], %s295
        %s297 = smul.u32 4, %s31
        %s298 = smul.u32 4, %s31
        %s299 = smul.u32 4, %s31
        %v300 = vld [vmem:[%s250] sm:$0xff]
        %v301 = vld [vmem:[%s250 + $0x8] sm:$0xff]
        %v302 = vld [vmem:[%s250 + $0x10] sm:$0xff]
        %v303 = vld [vmem:[%s250 + $0x18] sm:$0xff]
        %v304 = vld [vmem:[%s250 + $0x20] sm:$0xff]
        %v305 = vld [vmem:[%s250 + $0x28] sm:$0xff]
        %v306 = vld [vmem:[%s250 + $0x30] sm:$0xff]
        %v307 = vld [vmem:[%s250 + $0x38] sm:$0xff]
        %v308 = vld [vmem:[#allocation5] sm:$0xff]
        %v309 = vld [vmem:[#allocation5 + $0x8] sm:$0xff]
        %v310 = vld [vmem:[#allocation5 + $0x10] sm:$0xff]
        %v311 = vld [vmem:[#allocation5 + $0x18] sm:$0xff]
        %v312 = vld [vmem:[#allocation5 + $0x20] sm:$0xff]
        %v313 = vld [vmem:[#allocation5 + $0x28] sm:$0xff]
        %v314 = vld [vmem:[#allocation5 + $0x30] sm:$0xff]
        %v315 = vld [vmem:[#allocation5 + $0x38] sm:$0xff]
        %v316 = vld [vmem:[#allocation5 + $0x40] sm:$0xff]
        %v317 = vld [vmem:[#allocation5 + $0x48] sm:$0xff]
        %v318 = vld [vmem:[#allocation5 + $0x50] sm:$0xff]
        %v319 = vld [vmem:[#allocation5 + $0x58] sm:$0xff]
        %v320 = vld [vmem:[#allocation5 + $0x60] sm:$0xff]
        %v321 = vld [vmem:[#allocation5 + $0x68] sm:$0xff]
        %v322 = vld [vmem:[#allocation5 + $0x70] sm:$0xff]
        %v323 = vld [vmem:[#allocation5 + $0x78] sm:$0xff]
        %v324 = vld [vmem:[#allocation5 + $0x80] sm:$0xff]
        %v325 = vld [vmem:[#allocation5 + $0x88] sm:$0xff]
        %v326 = vld [vmem:[#allocation5 + $0x90] sm:$0xff]
        %v327 = vld [vmem:[#allocation5 + $0x98] sm:$0xff]
        %v328 = vld [vmem:[#allocation5 + $0xa0] sm:$0xff]
        %v329 = vld [vmem:[#allocation5 + $0xa8] sm:$0xff]
        %v330 = vld [vmem:[#allocation5 + $0xb0] sm:$0xff]
        %v331 = vld [vmem:[#allocation5 + $0xb8] sm:$0xff]
        %v332 = vld [vmem:[#allocation5 + $0xc0] sm:$0xff]
        %v333 = vld [vmem:[#allocation5 + $0xc8] sm:$0xff]
        %v334 = vld [vmem:[#allocation5 + $0xd0] sm:$0xff]
        %v335 = vld [vmem:[#allocation5 + $0xd8] sm:$0xff]
        %v336 = vld [vmem:[#allocation5 + $0xe0] sm:$0xff]
        %v337 = vld [vmem:[#allocation5 + $0xe8] sm:$0xff]
        %v338 = vld [vmem:[#allocation5 + $0xf0] sm:$0xff]
        %v339 = vld [vmem:[#allocation5 + $0xf8] sm:$0xff]
        %340 = vmatprep.subr.mxu0 0.0
        %341 = vmatpush1.msra.mxu0 %v308
        %342 = vmatprep.subr.mxu0 0.0
        %343 = vmatpush1.msra.mxu0 %v309
        %344 = vmatprep.subr.mxu0 0.0
        %345 = vmatpush1.msra.mxu0 %v310
        %346 = vmatprep.subr.mxu0 0.0
        %347 = vmatpush1.msra.mxu0 %v311
        %348 = vmatprep.subr.mxu0 0.0
        %349 = vmatpush1.msra.mxu0 %v312
        %350 = vmatprep.subr.mxu0 0.0
        %351 = vmatpush1.msra.mxu0 %v313
        %352 = vmatprep.subr.mxu0 0.0
        %353 = vmatpush1.msra.mxu0 %v314
        %354 = vmatprep.subr.mxu0 0.0
        %355 = vmatpush1.msra.mxu0 %v315
        %356 = vmatprep.subr.mxu0 0.0
        %357 = vmatpush1.msra.mxu0 %v316
        %358 = vmatprep.subr.mxu0 0.0
        %359 = vmatpush1.msra.mxu0 %v317
        %360 = vmatprep.subr.mxu0 0.0
        %361 = vmatpush1.msra.mxu0 %v318
        %362 = vmatprep.subr.mxu0 0.0
        %363 = vmatpush1.msra.mxu0 %v319
        %364 = vmatprep.subr.mxu0 0.0
        %365 = vmatpush1.msra.mxu0 %v320
        %366 = vmatprep.subr.mxu0 0.0
        %367 = vmatpush1.msra.mxu0 %v321
        %368 = vmatprep.subr.mxu0 0.0
        %369 = vmatpush1.msra.mxu0 %v322
        %370 = vmatprep.subr.mxu0 0.0
        %371 = vmatpush1.msra.mxu0 %v323
        %372 = vmatprep.subr.mxu0 0.0
        %373 = vmatpush1.msra.mxu0 %v324
        %374 = vmatprep.subr.mxu0 0.0
        %375 = vmatpush1.msra.mxu0 %v325
        %376 = vmatprep.subr.mxu0 0.0
        %377 = vmatpush1.msra.mxu0 %v326
        %378 = vmatprep.subr.mxu0 0.0
        %379 = vmatpush1.msra.mxu0 %v327
        %380 = vmatprep.subr.mxu0 0.0
        %381 = vmatpush1.msra.mxu0 %v328
        %382 = vmatprep.subr.mxu0 0.0
        %383 = vmatpush1.msra.mxu0 %v329
        %384 = vmatprep.subr.mxu0 0.0
        %385 = vmatpush1.msra.mxu0 %v330
        %386 = vmatprep.subr.mxu0 0.0
        %387 = vmatpush1.msra.mxu0 %v331
        %388 = vmatprep.subr.mxu0 0.0
        %389 = vmatpush1.msra.mxu0 %v332
        %390 = vmatprep.subr.mxu0 0.0
        %391 = vmatpush1.msra.mxu0 %v333
        %392 = vmatprep.subr.mxu0 0.0
        %393 = vmatpush1.msra.mxu0 %v334
        %394 = vmatprep.subr.mxu0 0.0
        %395 = vmatpush1.msra.mxu0 %v335
        %396 = vmatprep.subr.mxu0 0.0
        %397 = vmatpush1.msra.mxu0 %v336
        %398 = vmatprep.subr.mxu0 0.0
        %399 = vmatpush1.msra.mxu0 %v337
        %400 = vmatprep.subr.mxu0 0.0
        %401 = vmatpush1.msra.mxu0 %v338
        %402 = vmatprep.subr.mxu0 0.0
        %403 = vmatpush1.msra.mxu0 %v339
        %404 = vmatprep.mubr.f32.mxu0 %v301
        %405 = vmatmul.mubr.f32.gmra.mrb[0].mxu0 %v300
        %v406 = vpop.f32.mrb[0].mxu0
        %v407 = vadd.f32 0.0, %v406
        %v408 = vpop.f32.mrb[0].mxu0
        %409 = vmatprep.mubr.f32.mxu0 %v303
        %410 = vmatmul.mubr.f32.gmra.mrb[0].mxu0 %v302
        %v411 = vpop.f32.mrb[0].mxu0
        %v412 = vadd.f32 0.0, %v411
        %v413 = vpop.f32.mrb[0].mxu0
        %414 = vmatprep.mubr.f32.mxu0 %v305
        %415 = vmatmul.mubr.f32.gmra.mrb[0].mxu0 %v304
        %v416 = vpop.f32.mrb[0].mxu0
        %v417 = vadd.f32 0.0, %v416
        %v418 = vpop.f32.mrb[0].mxu0
        %419 = vmatprep.mubr.f32.mxu0 %v307
        %420 = vmatmul.mubr.f32.gmra.mrb[0].mxu0 %v306
        %v421 = vpop.f32.mrb[0].mxu0
        %v422 = vadd.f32 0.0, %v421
        %v423 = vpop.f32.mrb[0].mxu0
        %424 = vdwg.mxu0
        %v425 = vld [vmem:[%s263] sm:$0xff]
        %v426 = vld [vmem:[%s263 + $0x8] sm:$0xff]
        %v427 = vld [vmem:[%s263 + $0x10] sm:$0xff]
        %v428 = vld [vmem:[%s263 + $0x18] sm:$0xff]
        %v429 = vadd.f32 %v407, %v425
        %v430 = vadd.f32 %v412, %v426
        %v431 = vadd.f32 %v417, %v427
        %v432 = vadd.f32 %v422, %v428
        %433 = vst [vmem:[%s290] sm:$0xff] %v429
        %434 = vst [vmem:[%s290 + $0x8] sm:$0xff] %v430
        %435 = vst [vmem:[%s290 + $0x10] sm:$0xff] %v431
        %436 = vst [vmem:[%s290 + $0x18] sm:$0xff] %v432
        %p437 = scmp.eq.s32.totalorder %s31, 0
        // Predicated region
        $region45: #{tpu_custom_call.1} parent=31 // pred_check
          %p438 = pneg %p437
        $region46: #{tpu_custom_call.1} parent=31 // pred_check_branch
          %440 = sbr.rel (%p438) target = $region48
        $region47: #{tpu_custom_call.1} parent=31 // pred_region
          %441 = vst [vmem:[%s296] sm:$0x1] 0.0
        $region48: #{tpu_custom_call.1} parent=31 // pred_fallthru
          _
        %v442 = vld [vmem:[%s296] sm:$0x1]
        %v443 = vadd.f32 %v429, %v430
        %v444 = vadd.f32 %v443, %v431
        %v445 = vadd.f32 %v444, %v432
        %v446 = vrot.slane %v445, 4
        %v447 = vadd.f32 %v445, %v446
        %v448 = vrot.slane %v447, 2
        %v449 = vadd.f32 %v447, %v448
        %v450 = vrot.slane %v449, 1
        %v451 = vadd.f32 %v449, %v450
        %v452 = vadd.f32 %v442, %v451
        %453 = vst [vmem:[%s296] sm:$0x1] %v452
        %s454 = sand.u32 %s123, 1
        %s455 = scalar_lea.sflag [#allocation4], %s454
        %s456 = sand.u32 %s123, 1
        %s457 = smul.addr %s456, 32
        %s458 = scalar_lea.vmem [#allocation8], %s457
        %s459 = sand.u32 %s149, 1
        %s460 = scalar_lea.sflag [#allocation10], %s459
        %s461 = sand.u32 %s149, 1
        %s462 = scalar_lea.vmem [#allocation9], %s461
        // Predicated region
        $region49: #{tpu_custom_call.1} parent=31 // pred_check
          %p463 = pneg %p133
        $region50: #{tpu_custom_call.1} parent=31 // pred_check_branch
          %465 = sbr.rel (%p463) target = $region52
        $region51: #{tpu_custom_call.1} parent=31 // pred_region
          %s466 = smul.u32 4, %s31
          %s468 = ssub.s32 512, 512
          %469 = vsyncadd %s455, %s468
          %s470 = smul.addr %s30, 8
          %s471 = sadd.s32 %s466, %s470
          %s472 = smul.addr %s471, 128
          %s473 = scalar_lea.hbm %s3, %s472
          %s474 = sshll.u32 %s458, 4
          %s475 = int_to_ptr.vmem [resolvable:$true] %s474
          %480 = dma.vmem_to_hbm [thread:$0]  %s475, 512, %s473, %s455, 128, 128, 8
        $region52: #{tpu_custom_call.1} parent=31 // pred_fallthru
          _
        // Predicated region
        $region53: #{tpu_custom_call.1} parent=31 // pred_check
          %p481 = pneg %p159
        $region54: #{tpu_custom_call.1} parent=31 // pred_check_branch
          %483 = sbr.rel (%p481) target = $region56
        $region55: #{tpu_custom_call.1} parent=31 // pred_region
          %s485 = ssub.s32 16, 16
          %486 = vsyncadd %s460, %s485
          %s487 = smul.addr %s30, 16
          %s488 = scalar_lea.hbm %s4, %s487
          %s490 = sshll.u32 %s462, 4
          %s491 = int_to_ptr.vmem [resolvable:$true] %s490
          %493 = dma.vmem_to_hbm [thread:$0]  %s491, 16, %s488, %s460
        $region56: #{tpu_custom_call.1} parent=31 // pred_fallthru
          _
      $region32: #{tpu_custom_call.1} parent=5 // pred_fallthru
        _
      %p494 = scmp.le.s32.totalorder 2, %s21
      // Predicated region
      $region57: #{tpu_custom_call.1} parent=5 // pred_check
        %p495 = pneg %p494
      $region58: #{tpu_custom_call.1} parent=5 // pred_check_branch
        %497 = sbr.rel (%p495) target = $region60
      $region59: #{tpu_custom_call.1} parent=5 // pred_region
        %s498 = ssub.s32 %s21, 2
        // Predicated region
        $region61: #{tpu_custom_call.1} parent=59 // pred_check
          %p499 = pneg %p139
        $region62: #{tpu_custom_call.1} parent=59 // pred_check_branch
          %501 = sbr.rel (%p499) target = $region64
        $region63: #{tpu_custom_call.1} parent=59 // pred_region
          %s502 = sand.u32 %s124, 1
          %s503 = scalar_lea.sflag [#allocation4], %s502
          %s504 = sand.u32 %s124, 1
          %s505 = smul.addr %s504, 32
          %s506 = scalar_lea.vmem [#allocation8], %s505
          %507 = dma.done %s503, 512
        $region64: #{tpu_custom_call.1} parent=59 // pred_fallthru
          _
        // Predicated region
        $region65: #{tpu_custom_call.1} parent=59 // pred_check
          %p508 = pneg %p165
        $region66: #{tpu_custom_call.1} parent=59 // pred_check_branch
          %510 = sbr.rel (%p508) target = $region68
        $region67: #{tpu_custom_call.1} parent=59 // pred_region
          %s511 = sand.u32 %s150, 1
          %s512 = scalar_lea.sflag [#allocation10], %s511
          %s513 = sand.u32 %s150, 1
          %s514 = scalar_lea.vmem [#allocation9], %s513
          %515 = dma.done %s512, 16
        $region68: #{tpu_custom_call.1} parent=59 // pred_fallthru
          _
      $region60: #{tpu_custom_call.1} parent=5 // pred_fallthru
        _
    $region6: #{tpu_custom_call.1} parent=1 // loop_footer
      %s25 = sadd.s32 1, %s21
    $region7: #{tpu_custom_call.1} parent=1 // loop_footer_branch
      %20 = sbr.rel target = $region3
    $region8: #{tpu_custom_call.1} parent=1 // loop_exit
      _
    %516 = vsyncpa [#allocation3], 1
    %s517 = scalar_lea.sflag [#allocation3], 1
    %518 = vsyncpa %s517, 1
    %519 = vsyncpa [#allocation6], 1
    %520 = vsyncpa [#allocation4], 1
    %s521 = scalar_lea.sflag [#allocation4], 1
    %522 = vsyncpa %s521, 1
    %523 = vsyncpa [#allocation10], 1
    %s524 = scalar_lea.sflag [#allocation10], 1
    %525 = vsyncpa %s524, 1

</llo_original>
